<compile_context>
chip_gen: v6e
topology: v6e:2x2x1
jax: 0.10.0
libtpu: 0.0.40
codegen_flags: <defaults>
</compile_context>

<pallas_src>
import math

import jax
import jax.numpy as jnp
from jax import lax
from jax.experimental import pallas as pl
from jax.experimental.pallas import tpu as pltpu

_EPS = 1e-12  # matches torch F.normalize default


def _arc_margin_kernel(x_ref, xinv_ref, w_ref, winv_ref, out_ref):
    """One (TM, TN) output tile: (x_bf16 @ w_bf16.T)_f32 * xinv * winv."""
    # bf16 operands, f32 accumulation on the MXU.  Contract the shared last
    # (in_f) dim of both operands -- no materialized w.T / XLU transpose.
    logits = lax.dot_general(
        x_ref[...], w_ref[...],
        dimension_numbers=(((1,), (1,)), ((), ())),
        preferred_element_type=jnp.float32,
    )
    # Apply the hoisted f32 inverse norms: per-row (features) and per-column
    # (weight rows) scales.  Pure VPU work, no per-j recomputation.
    out_ref[...] = (logits * xinv_ref[...] * winv_ref[...]).astype(out_ref.dtype)


def _round_up(x, m):
    return (x + m - 1) // m * m


def _vmem_limit_bytes():
    """VMEM limit with headroom, derived from the physical part when possible."""
    try:
        cap = pltpu.get_tpu_info().vmem_capacity_bytes
    except Exception:  # non-TPU trace environments / API drift
        cap = 64 * 1024 * 1024  # assume the smallest (v7x) part
    # 5/8 of physical: 40 MiB on a 64 MiB v7x core, 80 MiB on 128 MiB parts.
    return min(int(cap) * 5 // 8, 80 * 1024 * 1024)


def _pick_tiles(batch, in_f, out_f_padded, vmem_limit):
    """Tile sizes: in_f is never tiled; lane-dense TN sized to the VMEM budget."""
    # Batch tile: up to 256 rows to fill the 256-wide MXU on v6e/v7x
    # (harmless on v5e's 4x128^2 MXU).
    tm = min(_round_up(batch, 8), 256)

    # Class tile: largest multiple of 128 such that the double-buffered
    # bf16 weight tile + bf16 feature tile + f32 output tile stay inside
    # ~80% of the VMEM limit (leaves room for compiler internals).
    budget = int(vmem_limit * 0.8)
    fixed = 2 * tm * in_f * 2                 # bf16 feature double-buffer
    per_tn = 2 * in_f * 2 + 2 * tm * 4        # bf16 weight (x2) + f32 out (x2)
    tn_cap = max(budget - fixed, 0) // per_tn // 128 * 128
    tn_cap = max(128, min(tn_cap, 4096))
    tn = min(out_f_padded, tn_cap)
    return tm, tn


def arc_margin_product(features: jax.Array, weight: jax.Array) -> jax.Array:
    """features: (B, in_features), weight: (out_features, in_features).

    Returns cosine logits (B, out_features) in float32, matching
    F.linear(F.normalize(features), F.normalize(weight)).
    """
    B, in_f = features.shape
    out_f, in_f2 = weight.shape
    assert in_f == in_f2, "feature dim mismatch"

    # --- Hoisted normalization scales (f32), fused by XLA with the bf16 casts.
    x32 = features.astype(jnp.float32)
    x_inv = lax.rsqrt(
        jnp.maximum(jnp.sum(x32 * x32, axis=1, keepdims=True), _EPS * _EPS)
    )                                                     # (B, 1)
    w32 = weight.astype(jnp.float32)
    w_inv = lax.rsqrt(
        jnp.maximum(jnp.sum(w32 * w32, axis=1), _EPS * _EPS)
    ).reshape(1, out_f)                                   # (1, out_f)

    # --- bf16 matmul operands (native MXU rate, half the HBM bytes).
    x_bf = features.astype(jnp.bfloat16)
    w_bf = weight.astype(jnp.bfloat16)

    # --- Pad to lane/sublane multiples so all blocks are full and output
    #     stores are unmasked, lane-dense vst.  Sliced off at the end.
    Bp = _round_up(B, 8)
    out_fp = _round_up(out_f, 128)
    if Bp != B:
        x_bf = jnp.pad(x_bf, ((0, Bp - B), (0, 0)))
        x_inv = jnp.pad(x_inv, ((0, Bp - B), (0, 0)), constant_values=1.0)
    if out_fp != out_f:
        w_bf = jnp.pad(w_bf, ((0, out_fp - out_f), (0, 0)))
        w_inv = jnp.pad(w_inv, ((0, 0), (0, out_fp - out_f)), constant_values=1.0)

    vmem_limit = _vmem_limit_bytes()
    tm, tn = _pick_tiles(Bp, in_f, out_fp, vmem_limit)

    num_j = pl.cdiv(out_fp, tn)   # class tiles   (outer -> weight tile resident)
    num_i = pl.cdiv(Bp, tm)       # batch tiles   (inner -> only features re-stream)
    grid = (num_j, num_i)

    cost = pl.CostEstimate(
        flops=2 * Bp * out_fp * in_f,
        transcendentals=0,  # rsqrt is hoisted to the wrapper
        bytes_accessed=(
            2 * out_fp * in_f          # bf16 weight, streamed once (j outer)
            + 2 * Bp * in_f * num_j    # bf16 features, re-streamed per class tile
            + 4 * Bp + 4 * out_fp      # f32 scales
            + 4 * Bp * out_fp          # f32 output
        ),
    )

    out = pl.pallas_call(
        _arc_margin_kernel,
        out_shape=jax.ShapeDtypeStruct((Bp, out_fp), jnp.float32),
        grid=grid,
        in_specs=[
            pl.BlockSpec((tm, in_f), lambda j, i: (i, 0)),   # features (bf16)
            pl.BlockSpec((tm, 1), lambda j, i: (i, 0)),      # 1/||x_row|| (f32)
            pl.BlockSpec((tn, in_f), lambda j, i: (j, 0)),   # weight (bf16), const over i
            pl.BlockSpec((1, tn), lambda j, i: (0, j)),      # 1/||w_row|| (f32)
        ],
        out_specs=pl.BlockSpec((tm, tn), lambda j, i: (i, j)),
        compiler_params=pltpu.CompilerParams(
            dimension_semantics=("parallel", "parallel"),
            vmem_limit_bytes=vmem_limit,
        ),
        cost_estimate=cost,
    )(x_bf, x_inv, w_bf, w_inv)

    return out[:B, :out_f]


def xavier_uniform(key, out_features, in_features):
    """Deterministic stand-in for nn.init.xavier_uniform on (out, in) weight."""
    bound = math.sqrt(6.0 / (in_features + out_features))
    return jax.random.uniform(
        key, (out_features, in_features), dtype=jnp.float32,
        minval=-bound, maxval=bound)


if __name__ == "__main__":
    B, IN_F, OUT_F = 8, 32, 16

    key = jax.random.PRNGKey(0)
    k_feat, k_w = jax.random.split(key)

    features = jax.random.normal(k_feat, (B, IN_F), dtype=jnp.float32)
    weight = xavier_uniform(k_w, OUT_F, IN_F)

    logits = arc_margin_product(features, weight)
    jax.block_until_ready(logits)

    # Pure-JAX f32 reference (torch F.normalize semantics).
    def ref(x, w, eps=_EPS):
        xn = x / jnp.maximum(jnp.linalg.norm(x, axis=-1, keepdims=True), eps)
        wn = w / jnp.maximum(jnp.linalg.norm(w, axis=-1, keepdims=True), eps)
        return xn @ wn.T

    expected = ref(features, weight)
    assert logits.shape == (B, OUT_F)
    # bf16 matmul operands (f32 accumulation, f32 scales): cosines are in
    # [-1, 1], so a ~1e-2 absolute tolerance covers the bf16 input rounding.
    max_err = float(jnp.max(jnp.abs(logits - expected)))
    assert max_err < 2e-2, f"mismatch vs reference: max abs err {max_err}"

    print("KERNEL_OK")
</pallas_src>

<mosaic_0001>
module attributes {stable_mosaic.version = 11 : i64} {
  func.func @_arc_margin_kernel(%arg0: i32, %arg1: i32, %arg2: memref<8x32xbf16, #tpu.memory_space<vmem>>, %arg3: memref<8x1xf32, #tpu.memory_space<vmem>>, %arg4: memref<128x32xbf16, #tpu.memory_space<vmem>>, %arg5: memref<1x128xf32, #tpu.memory_space<vmem>>, %arg6: memref<8x128xf32, #tpu.memory_space<vmem>>) attributes {dimension_semantics = [#tpu.dimension_semantics<parallel>, #tpu.dimension_semantics<parallel>], iteration_bounds = array<i64: 1, 1>, scalar_prefetch = 0 : i64, scratch_operands = 0 : i64, tpu.core_type = #tpu.core_type<tc>, window_params = [{transform_indices = @transform_0, window_bounds = array<i64: 8, 32>}, {transform_indices = @transform_1, window_bounds = array<i64: 8, 1>}, {transform_indices = @transform_2, window_bounds = array<i64: 128, 32>}, {transform_indices = @transform_3, window_bounds = array<i64: 1, 128>}, {transform_indices = @transform_4, window_bounds = array<i64: 8, 128>}]} {
    %c0 = arith.constant 0 : index
    %c0_0 = arith.constant 0 : index
    %0 = vector.load %arg2[%c0, %c0_0] : memref<8x32xbf16, #tpu.memory_space<vmem>>, vector<8x32xbf16>
    %c0_1 = arith.constant 0 : index
    %c0_2 = arith.constant 0 : index
    %1 = vector.load %arg4[%c0_1, %c0_2] : memref<128x32xbf16, #tpu.memory_space<vmem>>, vector<128x32xbf16>
    %cst = arith.constant dense<0.000000e+00> : vector<8x128xf32>
    %2 = tpu.matmul %0, %1, %cst {dimension_numbers = #tpu.dot_dimension_numbers<[1], [1], [0], [0], [0, 0, 1, 0], [], []>} : vector<8x32xbf16>, vector<128x32xbf16>, vector<8x128xf32> -> vector<8x128xf32>
    %c0_3 = arith.constant 0 : index
    %c0_4 = arith.constant 0 : index
    %3 = vector.load %arg3[%c0_3, %c0_4] : memref<8x1xf32, #tpu.memory_space<vmem>>, vector<8x1xf32>
    %4 = vector.broadcast %3 : vector<8x1xf32> to vector<8x128xf32>
    %5 = arith.mulf %2, %4 : vector<8x128xf32>
    %c0_5 = arith.constant 0 : index
    %c0_6 = arith.constant 0 : index
    %6 = vector.load %arg5[%c0_5, %c0_6] : memref<1x128xf32, #tpu.memory_space<vmem>>, vector<1x128xf32>
    %7 = vector.broadcast %6 : vector<1x128xf32> to vector<8x128xf32>
    %8 = arith.mulf %5, %7 : vector<8x128xf32>
    %c0_7 = arith.constant 0 : index
    %c0_8 = arith.constant 0 : index
    %9 = vector.load %arg6[%c0_7, %c0_8] : memref<8x128xf32, #tpu.memory_space<vmem>>, vector<8x128xf32>
    tpu.vector_store %arg6[%c0_7, %c0_8], %8 {strides = array<i32>} : memref<8x128xf32, #tpu.memory_space<vmem>>, vector<8x128xf32>,
    return
  }
  func.func @transform_0(%arg0: i32, %arg1: i32) -> (i32, i32) {
    %c0_i32 = arith.constant 0 : i32
    %c0_i32_0 = arith.constant 0 : i32
    return %arg1, %c0_i32 : i32, i32
  }
  func.func @transform_1(%arg0: i32, %arg1: i32) -> (i32, i32) {
    %c0_i32 = arith.constant 0 : i32
    %c0_i32_0 = arith.constant 0 : i32
    return %arg1, %c0_i32 : i32, i32
  }
  func.func @transform_2(%arg0: i32, %arg1: i32) -> (i32, i32) {
    %c0_i32 = arith.constant 0 : i32
    %c0_i32_0 = arith.constant 0 : i32
    return %arg0, %c0_i32 : i32, i32
  }
  func.func @transform_3(%arg0: i32, %arg1: i32) -> (i32, i32) {
    %c0_i32 = arith.constant 0 : i32
    %c0_i32_0 = arith.constant 0 : i32
    return %c0_i32, %arg0 : i32, i32
  }
  func.func @transform_4(%arg0: i32, %arg1: i32) -> (i32, i32) {
    %c0_i32 = arith.constant 0 : i32
    return %arg1, %arg0 : i32, i32
  }
}

</mosaic_0001>

<llo_original>
// kernel: tpu_custom_call.1
$region0: #{tpu_custom_call.1}
  #allocation0 [shape = 'u32[]', space=smem, size = 0x4, offset = 0x4, fixed_abs, tag = 'smem constant byte address 0x4 - core index']
  #allocation1 [shape = 'u32[144,128]{1,0:T(1,128)}', space=vmem, size = 0x12000, scoped, tag = 'internal scratch']
  %s0 = inlined_call_operand.vmem [shape: bf16[8,32], index: 0, kind: input, shape index: {}]
  %s1 = inlined_call_operand.vmem [shape: f32[8,1], index: 1, kind: input, shape index: {}]
  %s2 = inlined_call_operand.vmem [shape: bf16[128,32], index: 2, kind: input, shape index: {}]
  %s3 = inlined_call_operand.vmem [shape: f32[1,128], index: 3, kind: input, shape index: {}]
  %s4 = inlined_call_operand.hbm [shape: f32[8,128], index: 4, kind: output, shape index: {}]
  %s5 = sld [smem:[#allocation0]]
  $region26: #{tpu_custom_call.1} parent=0
    _
  %s7 = ssub.s32 1, %s5
  %s8 = scalar_select 0, %s7, %s5
  $region1: #{tpu_custom_call.1} parent=0
    #allocation2 [shape = 'u8[4096]{0}', space=vmem, size = 0x1000, scoped, tag = 'output window, operand 0, single buffered']
    #allocation3 [shape = 's32[1]{0}', space=sflag, size = 0x4, scoped, tag = 'scoped memory for tpu_custom_call.1']
    %9 = vsyncpa [#allocation3], 0
    // Predicated region
    $region2: #{tpu_custom_call.1} parent=1 // pred_check
      _
    $region3: #{tpu_custom_call.1} parent=1 // pred_check_branch
      %11 = sbr.rel (0) target = $region5
    $region4: #{tpu_custom_call.1} parent=1 // pred_region
      _
    $region5: #{tpu_custom_call.1} parent=1 // pred_fallthru
      _
    // Predicated region
    $region6: #{tpu_custom_call.1} parent=1 // pred_check
      _
    $region7: #{tpu_custom_call.1} parent=1 // pred_check_branch
      %13 = sbr.rel (0) target = $region9
    $region8: #{tpu_custom_call.1} parent=1 // pred_region
      _
    $region9: #{tpu_custom_call.1} parent=1 // pred_fallthru
      _
    // Predicated region
    $region10: #{tpu_custom_call.1} parent=1 // pred_check
      _
    $region11: #{tpu_custom_call.1} parent=1 // pred_check_branch
      %15 = sbr.rel (0) target = $region13
    $region12: #{tpu_custom_call.1} parent=1 // pred_region
      _
    $region13: #{tpu_custom_call.1} parent=1 // pred_fallthru
      _
    // Predicated region
    $region14: #{tpu_custom_call.1} parent=1 // pred_check
      _
    $region15: #{tpu_custom_call.1} parent=1 // pred_check_branch
      %17 = sbr.rel (0) target = $region17
    $region16: #{tpu_custom_call.1} parent=1 // pred_region
      _
    $region17: #{tpu_custom_call.1} parent=1 // pred_fallthru
      _
    %v19 = vld [vmem:[%s0] sm:$0xf]
    %v20 = vld [vmem:[%s2] sm:$0xf]
    %v21 = vld [vmem:[%s2 + $0x4] sm:$0xf]
    %v22 = vld [vmem:[%s2 + $0x8] sm:$0xf]
    %v23 = vld [vmem:[%s2 + $0xc] sm:$0xf]
    %v24 = vld [vmem:[%s2 + $0x10] sm:$0xf]
    %v25 = vld [vmem:[%s2 + $0x14] sm:$0xf]
    %v26 = vld [vmem:[%s2 + $0x18] sm:$0xf]
    %v27 = vld [vmem:[%s2 + $0x1c] sm:$0xf]
    %v28 = vld [vmem:[%s2 + $0x20] sm:$0xf]
    %v29 = vld [vmem:[%s2 + $0x24] sm:$0xf]
    %v30 = vld [vmem:[%s2 + $0x28] sm:$0xf]
    %v31 = vld [vmem:[%s2 + $0x2c] sm:$0xf]
    %v32 = vld [vmem:[%s2 + $0x30] sm:$0xf]
    %v33 = vld [vmem:[%s2 + $0x34] sm:$0xf]
    %v34 = vld [vmem:[%s2 + $0x38] sm:$0xf]
    %v35 = vld [vmem:[%s2 + $0x3c] sm:$0xf]
    %v52 = vunpack.c.l.b16 %v20
    %v53 = vunpack.c.l.b16 %v21
    %v54 = vunpack.c.l.b16 %v22
    %v55 = vunpack.c.l.b16 %v23
    %v56 = vunpack.c.l.b16 %v24
    %v57 = vunpack.c.l.b16 %v25
    %v58 = vunpack.c.l.b16 %v26
    %v59 = vunpack.c.l.b16 %v27
    %v60 = vunpack.c.l.b16 %v28
    %v61 = vunpack.c.l.b16 %v29
    %v62 = vunpack.c.l.b16 %v30
    %v63 = vunpack.c.l.b16 %v31
    %v64 = vunpack.c.l.b16 %v32
    %v65 = vunpack.c.l.b16 %v33
    %v66 = vunpack.c.l.b16 %v34
    %v67 = vunpack.c.l.b16 %v35
    %v68 = vpack.c.b16 %v53, %v52
    %v69 = vpack.c.b16 %v55, %v54
    %v70 = vpack.c.b16 %v57, %v56
    %v71 = vpack.c.b16 %v59, %v58
    %v72 = vpack.c.b16 %v61, %v60
    %v73 = vpack.c.b16 %v63, %v62
    %v74 = vpack.c.b16 %v65, %v64
    %v75 = vpack.c.b16 %v67, %v66
    %vm76 = vcmask 261120
    %v78 = vsel %vm76, %v19, 0
    %v81 = vsel %vm76, %v68, 0
    %v84 = vsel %vm76, %v69, 0
    %v87 = vsel %vm76, %v70, 0
    %v90 = vsel %vm76, %v71, 0
    %v93 = vsel %vm76, %v72, 0
    %v96 = vsel %vm76, %v73, 0
    %v99 = vsel %vm76, %v74, 0
    %v102 = vsel %vm76, %v75, 0
    %104 = vmatprep.subr.bf16.mxu0 0
    %105 = vmatpush1.bf16.xpose.msra.mxu0 %v102
    %106 = vmatprep.subr.bf16.mxu0 0
    %107 = vmatpush1.bf16.xpose.msra.mxu0 %v99
    %108 = vmatprep.subr.bf16.mxu0 0
    %109 = vmatpush1.bf16.xpose.msra.mxu0 %v96
    %110 = vmatprep.subr.bf16.mxu0 0
    %111 = vmatpush1.bf16.xpose.msra.mxu0 %v93
    %112 = vmatprep.subr.bf16.mxu0 0
    %113 = vmatpush1.bf16.xpose.msra.mxu0 %v90
    %114 = vmatprep.subr.bf16.mxu0 0
    %115 = vmatpush1.bf16.xpose.msra.mxu0 %v87
    %116 = vmatprep.subr.bf16.mxu0 0
    %117 = vmatpush1.bf16.xpose.msra.mxu0 %v84
    %118 = vmatprep.subr.bf16.mxu0 0
    %119 = vmatpush1.bf16.xpose.msra.mxu0 %v81
    %120 = vmatprep.subr.bf16.mxu0 0
    %121 = vmatpush2.bf16.xpose.msra.mxu0 0
    %122 = vmatprep.subr.bf16.mxu0 0
    %123 = vmatpush2.bf16.xpose.msra.mxu0 0
    %124 = vmatprep.subr.bf16.mxu0 0
    %125 = vmatpush2.bf16.xpose.msra.mxu0 0
    %126 = vmatprep.subr.bf16.mxu0 0
    %127 = vmatpush2.bf16.xpose.msra.mxu0 0
    %128 = vmatprep.subr.bf16.mxu0 0
    %129 = vmatpush2.bf16.xpose.msra.mxu0 0
    %130 = vmatprep.subr.bf16.mxu0 0
    %131 = vmatpush2.bf16.xpose.msra.mxu0 0
    %132 = vmatprep.subr.bf16.mxu0 0
    %133 = vmatpush2.bf16.xpose.msra.mxu0 0
    %134 = vmatprep.subr.bf16.mxu0 0
    %135 = vmatpush2.bf16.xpose.msra.mxu0 0
    %136 = vmatprep.mubr.bf16.mxu0 0
    %137 = vmatmul.mubr.bf16.gmra.mxu0 %v78
    %v138 = vpop.f32.mrf.mxu0
    %v139 = vadd.f32 0.0, %v138
    %v140 = vpop.f32.mrf.mxu0
    %v141 = vpop.f32.mrf.mxu0
    %v142 = vpop.f32.mrf.mxu0
    %143 = vdwg.mxu0
    %v144 = vld [vmem:[%s1] sm:$0xff]
    %146 = vset.pattern.permute.xlu0 0
    %147 = vperm.xlu0 %146, %v144
    %v148 = vpop.permute.xlu0 %147
    %v150 = vmul.f32 %v139, %v148
    %v151 = vld [vmem:[%s3] sm:$0x1]
    %v153 = vlaneseq
    %v154 = vshrl.u32 %v153, 7
    %v155 = vsub.s32 0, %v154
    %v156 = vrot.slane %v151, %v155
    %v158 = vmul.f32 %v150, %v156
    %159 = vst [vmem:[#allocation2] sm:$0xff] %v158
    // Predicated region
    $region18: #{tpu_custom_call.1} parent=1 // pred_check
      _
    $region19: #{tpu_custom_call.1} parent=1 // pred_check_branch
      %161 = sbr.rel (0) target = $region21
    $region20: #{tpu_custom_call.1} parent=1 // pred_region
      %s163 = ssub.s32 128, 128
      %164 = vsyncadd [#allocation3], %s163
      %s166 = sshll.u32 [#allocation2], 4
      %s167 = int_to_ptr.vmem [resolvable:$true] %s166
      %169 = dma.vmem_to_hbm [thread:$0]  %s167, 128, %s4, [#allocation3]
    $region21: #{tpu_custom_call.1} parent=1 // pred_fallthru
      _
    // Predicated region
    $region22: #{tpu_custom_call.1} parent=1 // pred_check
      _
    $region23: #{tpu_custom_call.1} parent=1 // pred_check_branch
      %171 = sbr.rel (0) target = $region25
    $region24: #{tpu_custom_call.1} parent=1 // pred_region
      %172 = dma.done [#allocation3], 128
    $region25: #{tpu_custom_call.1} parent=1 // pred_fallthru
      _
    %173 = vsyncpa [#allocation3], 1

</llo_original>
